<compile_context>
chip_gen: v7x
topology: tpu7x:2x2x1
jax: 0.10.0
libtpu: 0.0.40
codegen_flags: <defaults>
</compile_context>

<pallas_src>
import numpy as np
import jax
import jax.numpy as jnp
from jax import lax
from jax.experimental import pallas as pl
from jax.experimental.pallas import tpu as pltpu

EPS = 1e-5
NEG_SLOPE = 1.0          # LeakyReLU(True): negative_slope == True == 1.0 (identity)
KH = KW = 4
STRIDE = 2
PAD = 1
LANES = 128


def _round_up(x, m):
    return (x + m - 1) // m * m


# ----------------------------------------------------------------------------
# Kernel: K-tiled conv matmul + per-M-tile BatchNorm partial statistics.
#   cols:  [tile_m, tile_k] bf16      w: [tile_k, Coutp] bf16
#   y:     [tile_m, Coutp]  bf16 (written at k == last)
#   stats: [1, 8, Coutp]    f32  (row 0 = sum, row 1 = sum of squares)
#   acc:   [tile_m, Coutp]  f32  VMEM scratch accumulator
# ----------------------------------------------------------------------------
def conv_stats_kernel(cols_ref, w_ref, y_ref, stats_ref, acc_ref):
    k = pl.program_id(1)
    nk = pl.num_programs(1)

    @pl.when(k == 0)
    def _init():
        acc_ref[...] = jnp.zeros_like(acc_ref)

    # MXU matmul: bf16 x bf16 -> f32 accumulate.
    acc_ref[...] += jnp.dot(cols_ref[...], w_ref[...],
                            preferred_element_type=jnp.float32)

    @pl.when(k == nk - 1)
    def _finalize():
        y = acc_ref[...]
        y_ref[...] = y.astype(y_ref.dtype)              # bf16 store (half the HBM bytes)
        # Partial BN stats from the f32 accumulator (before the bf16 cast).
        # TODO(synk): for very large M consider shifted/Welford accumulation.
        s = jnp.sum(y, axis=0, keepdims=True)           # (1, Coutp)
        q = jnp.sum(y * y, axis=0, keepdims=True)       # (1, Coutp)
        pad = jnp.zeros((6, y.shape[1]), jnp.float32)
        stats_ref[...] = jnp.concatenate([s, q, pad], axis=0)[None]


def downblock_forward(x, Wc, gamma, beta, *, tile_m=1024, tile_k=512):
    """x: [N, Cin, H, W] (NCHW). Wc: [Cout, Cin, 4, 4] (Conv2d weight, bias=False).
    Returns [N, Cout, H//2, W//2] (training-mode BatchNorm, LeakyReLU(True))."""
    N, Cin, H, W = x.shape
    Cout = Wc.shape[0]
    Hout = (H + 2 * PAD - KH) // STRIDE + 1
    Wout = (W + 2 * PAD - KW) // STRIDE + 1

    # ---- XLA glue: NHWC im2col (strided slices + channel concat; no big transpose) ----
    x_nhwc = jnp.transpose(x, (0, 2, 3, 1))                       # one pass over x only
    xp = jnp.pad(x_nhwc, ((0, 0), (PAD, PAD), (PAD, PAD), (0, 0)))
    taps = [xp[:, kh:kh + STRIDE * Hout:STRIDE, kw:kw + STRIDE * Wout:STRIDE, :]
            for kh in range(KH) for kw in range(KW)]              # each [N, Hout, Wout, Cin]
    cols = jnp.concatenate(taps, axis=-1).reshape(N * Hout * Wout, KH * KW * Cin)
    # Weight in matching (kh, kw, ic) x Cout order.
    Wm = jnp.transpose(Wc, (2, 3, 1, 0)).reshape(KH * KW * Cin, Cout)

    M, K = cols.shape
    Coutp = _round_up(Cout, LANES)               # lane-dense, unmasked stores (keep at 128)

    # K tiling: keep full K resident when small, tile it for large Cin.
    if K > 2048:
        tile_k = min(_round_up(tile_k, 128), 2048)
    else:
        tile_k = K
    Kp = _round_up(K, tile_k)
    grid_k = Kp // tile_k

    # M tiling: multiples of 16 (bf16 sublane packing); big tiles amortize grid overhead.
    tile_m = max(16, min(tile_m, _round_up(M, 16)))
    tile_m = _round_up(tile_m, 16)
    Mp = _round_up(M, tile_m)
    grid_m = Mp // tile_m

    # bf16 streamed operands, zero-padded to tile edges (zeros contribute nothing).
    cols_p = jnp.pad(cols, ((0, Mp - M), (0, Kp - K))).astype(jnp.bfloat16)
    Wm_p = jnp.pad(Wm, ((0, Kp - K), (0, Coutp - Cout))).astype(jnp.bfloat16)

    # VMEM budget for the chosen tiling (double-buffered ins/outs + f32 accumulator).
    vmem_bytes = (2 * (tile_m * tile_k * 2 + tile_k * Coutp * 2
                       + tile_m * Coutp * 2 + 8 * Coutp * 4)
                  + tile_m * Coutp * 4)
    vmem_limit = int(vmem_bytes * 1.25) + (2 << 20)
    vmem_limit = min(max(vmem_limit, 16 << 20), 64 << 20)

    y, stats = pl.pallas_call(
        conv_stats_kernel,
        out_shape=(jax.ShapeDtypeStruct((Mp, Coutp), jnp.bfloat16),
                   jax.ShapeDtypeStruct((grid_m, 8, Coutp), jnp.float32)),
        grid=(grid_m, grid_k),
        in_specs=[pl.BlockSpec((tile_m, tile_k), lambda i, k: (i, k)),
                  pl.BlockSpec((tile_k, Coutp), lambda i, k: (k, 0))],
        out_specs=(pl.BlockSpec((tile_m, Coutp), lambda i, k: (i, 0)),
                   pl.BlockSpec((1, 8, Coutp), lambda i, k: (i, 0, 0))),
        scratch_shapes=[pltpu.VMEM((tile_m, Coutp), jnp.float32)],
        compiler_params=pltpu.CompilerParams(
            dimension_semantics=("parallel", "arbitrary"),   # M tiles independent, K reduces
            vmem_limit_bytes=vmem_limit),
        cost_estimate=pl.CostEstimate(
            flops=2 * Mp * Kp * Coutp + 4 * Mp * Coutp,
            transcendentals=0,
            bytes_accessed=(Mp * Kp * 2 + grid_m * Kp * Coutp * 2
                            + Mp * Coutp * 2 + grid_m * 8 * Coutp * 4)),
    )(cols_p, Wm_p)

    # ---- XLA epilogue (fused): fold BN (training mode, biased var) + LeakyReLU
    #      into the reshape/transpose back to NCHW.  Padded rows/cols are zero
    #      in the partial sums; divide by the true M and slice the true Cout.
    s1 = jnp.sum(stats[:, 0, :Cout], axis=0)
    s2 = jnp.sum(stats[:, 1, :Cout], axis=0)
    mean = s1 / M
    var = jnp.maximum(s2 / M - mean * mean, 0.0)
    a = gamma.astype(jnp.float32) * lax.rsqrt(var + EPS)
    b = beta.astype(jnp.float32) - mean * a

    out = y[:M, :Cout].astype(jnp.float32) * a + b
    out = jnp.where(out >= 0, out, NEG_SLOPE * out)      # slope 1.0 == identity
    out = out.reshape(N, Hout, Wout, Cout)
    return jnp.transpose(out, (0, 3, 1, 2))


# ----------------------------------------------------------------------------
# NumPy reference of the exact PyTorch forward (direct conv definition).
# ----------------------------------------------------------------------------
def ref_forward_np(x, Wc, gamma, beta):
    x = np.asarray(x, np.float32)
    Wc = np.asarray(Wc, np.float32)
    N, Cin, H, W = x.shape
    Cout = Wc.shape[0]
    Hout = (H + 2 * PAD - KH) // STRIDE + 1
    Wout = (W + 2 * PAD - KW) // STRIDE + 1
    xp = np.pad(x, ((0, 0), (0, 0), (PAD, PAD), (PAD, PAD)))
    y = np.zeros((N, Cout, Hout, Wout), np.float32)
    for oh in range(Hout):
        for ow in range(Wout):
            patch = xp[:, :, STRIDE * oh:STRIDE * oh + KH, STRIDE * ow:STRIDE * ow + KW]
            y[:, :, oh, ow] = np.einsum('ncij,ocij->no', patch, Wc)
    mean = y.mean(axis=(0, 2, 3), keepdims=True)
    var = y.var(axis=(0, 2, 3), keepdims=True)          # biased, training-mode BN
    yb = (y - mean) / np.sqrt(var + EPS)
    yb = yb * np.asarray(gamma, np.float32).reshape(1, -1, 1, 1) \
         + np.asarray(beta, np.float32).reshape(1, -1, 1, 1)
    return np.where(yb >= 0, yb, NEG_SLOPE * yb)         # slope 1.0 == identity


if __name__ == "__main__":
    key = jax.random.PRNGKey(0)
    k_x, k_w, k_g, k_b = jax.random.split(key, 4)

    # DownBlock(in_channels=4, out_channels=8); batch=2, spatial=16 -> 8x8 output.
    N, Cin, Cout, H, W = 2, 4, 8, 16, 16
    x = jax.random.normal(k_x, (N, Cin, H, W), dtype=jnp.float32)
    Wc = 0.1 * jax.random.normal(k_w, (Cout, Cin, KH, KW), dtype=jnp.float32)
    gamma = 1.0 + 0.1 * jax.random.normal(k_g, (Cout,), dtype=jnp.float32)
    beta = 0.1 * jax.random.normal(k_b, (Cout,), dtype=jnp.float32)

    # Pre-truncate streamed operands to bf16-representable values so the f32
    # NumPy reference and the bf16-MXU kernel see identical inputs.
    x = x.astype(jnp.bfloat16).astype(jnp.float32)
    Wc = Wc.astype(jnp.bfloat16).astype(jnp.float32)

    # tile_m=32 exercises the multi-tile (grid_m=4) path at these small shapes.
    fwd = jax.jit(lambda x, w, g, b: downblock_forward(x, w, g, b, tile_m=32, tile_k=512))
    out = jax.block_until_ready(fwd(x, Wc, gamma, beta))

    ref = ref_forward_np(x, Wc, gamma, beta)
    assert out.shape == (N, Cout, H // 2, W // 2), out.shape
    # Tolerance reflects the bf16 conv intermediate (stats are accumulated in f32).
    np.testing.assert_allclose(np.asarray(out), ref, atol=5e-3, rtol=5e-3)

    print("KERNEL_OK")
</pallas_src>

<mosaic_0001>
module attributes {stable_mosaic.version = 11 : i64} {
  func.func @conv_stats_kernel(%arg0: i32, %arg1: i32, %arg2: memref<32x64xbf16, #tpu.memory_space<vmem>>, %arg3: memref<64x128xbf16, #tpu.memory_space<vmem>>, %arg4: memref<32x128xbf16, #tpu.memory_space<vmem>>, %arg5: memref<1x8x128xf32, #tpu.memory_space<vmem>>, %arg6: memref<32x128xf32, #tpu.memory_space<vmem>>) attributes {dimension_semantics = [#tpu.dimension_semantics<parallel>, #tpu.dimension_semantics<arbitrary>], iteration_bounds = array<i64: 4, 1>, scalar_prefetch = 0 : i64, scratch_operands = 1 : i64, tpu.core_type = #tpu.core_type<tc>, window_params = [{transform_indices = @transform_0, window_bounds = array<i64: 32, 64>}, {transform_indices = @transform_1, window_bounds = array<i64: 64, 128>}, {transform_indices = @transform_2, window_bounds = array<i64: 32, 128>}, {transform_indices = @transform_3, window_bounds = array<i64: 1, 8, 128>}]} {
    %c0_i32 = arith.constant 0 : i32
    %0 = arith.cmpi eq, %arg1, %c0_i32 : i32
    %1 = arith.extui %0 : i1 to i32
    %c0_i32_0 = arith.constant 0 : i32
    %2 = arith.cmpi ne, %1, %c0_i32_0 : i32
    scf.if %2 {
      %cst_10 = arith.constant 0.000000e+00 : f32
      %12 = vector.broadcast %cst_10 : f32 to vector<32x128xf32>
      %c0_11 = arith.constant 0 : index
      %c0_12 = arith.constant 0 : index
      %13 = vector.load %arg6[%c0_11, %c0_12] : memref<32x128xf32, #tpu.memory_space<vmem>>, vector<32x128xf32>
      tpu.vector_store %arg6[%c0_11, %c0_12], %12 {strides = array<i32>} : memref<32x128xf32, #tpu.memory_space<vmem>>, vector<32x128xf32>,
    } else {
    }
    %c0 = arith.constant 0 : index
    %c0_1 = arith.constant 0 : index
    %3 = vector.load %arg6[%c0, %c0_1] : memref<32x128xf32, #tpu.memory_space<vmem>>, vector<32x128xf32>
    %c0_2 = arith.constant 0 : index
    %c0_3 = arith.constant 0 : index
    %4 = vector.load %arg2[%c0_2, %c0_3] : memref<32x64xbf16, #tpu.memory_space<vmem>>, vector<32x64xbf16>
    %c0_4 = arith.constant 0 : index
    %c0_5 = arith.constant 0 : index
    %5 = vector.load %arg3[%c0_4, %c0_5] : memref<64x128xbf16, #tpu.memory_space<vmem>>, vector<64x128xbf16>
    %cst = arith.constant dense<0.000000e+00> : vector<32x128xf32>
    %6 = tpu.matmul %4, %5, %cst {dimension_numbers = #tpu.dot_dimension_numbers<[1], [0], [0], [1], [0, 0, 1, 1], [], []>} : vector<32x64xbf16>, vector<64x128xbf16>, vector<32x128xf32> -> vector<32x128xf32>
    %7 = arith.addf %3, %6 : vector<32x128xf32>
    %c0_6 = arith.constant 0 : index
    %c0_7 = arith.constant 0 : index
    %8 = vector.load %arg6[%c0_6, %c0_7] : memref<32x128xf32, #tpu.memory_space<vmem>>, vector<32x128xf32>
    tpu.vector_store %arg6[%c0_6, %c0_7], %7 {strides = array<i32>} : memref<32x128xf32, #tpu.memory_space<vmem>>, vector<32x128xf32>,
    %c0_i32_8 = arith.constant 0 : i32
    %9 = arith.cmpi eq, %arg1, %c0_i32_8 : i32
    %10 = arith.extui %9 : i1 to i32
    %c0_i32_9 = arith.constant 0 : i32
    %11 = arith.cmpi ne, %10, %c0_i32_9 : i32
    scf.if %11 {
      %c0_10 = arith.constant 0 : index
      %c0_11 = arith.constant 0 : index
      %12 = vector.load %arg6[%c0_10, %c0_11] : memref<32x128xf32, #tpu.memory_space<vmem>>, vector<32x128xf32>
      %13 = arith.truncf %12 : vector<32x128xf32> to vector<32x128xbf16>
      %c0_12 = arith.constant 0 : index
      %c0_13 = arith.constant 0 : index
      %14 = vector.load %arg4[%c0_12, %c0_13] : memref<32x128xbf16, #tpu.memory_space<vmem>>, vector<32x128xbf16>
      tpu.vector_store %arg4[%c0_12, %c0_13], %13 {strides = array<i32>} : memref<32x128xbf16, #tpu.memory_space<vmem>>, vector<32x128xbf16>,
      %cst_14 = arith.constant dense<0.000000e+00> : vector<128xf32>
      %15 = vector.multi_reduction <add>, %12, %cst_14 [0] : vector<32x128xf32> to vector<128xf32>
      %16 = vector.shape_cast %15 : vector<128xf32> to vector<1x128xf32>
      %17 = arith.mulf %12, %12 : vector<32x128xf32>
      %cst_15 = arith.constant dense<0.000000e+00> : vector<128xf32>
      %18 = vector.multi_reduction <add>, %17, %cst_15 [0] : vector<32x128xf32> to vector<128xf32>
      %19 = vector.shape_cast %18 : vector<128xf32> to vector<1x128xf32>
      %cst_16 = arith.constant 0.000000e+00 : f32
      %20 = vector.broadcast %cst_16 : f32 to vector<6x128xf32>
      %21 = tpu.concatenate %16, %19, %20 in 0 : vector<1x128xf32>, vector<1x128xf32>, vector<6x128xf32> -> vector<8x128xf32>
      %22 = vector.shape_cast %21 : vector<8x128xf32> to vector<1x8x128xf32>
      %c0_17 = arith.constant 0 : index
      %c0_18 = arith.constant 0 : index
      %c0_19 = arith.constant 0 : index
      %23 = vector.load %arg5[%c0_17, %c0_18, %c0_19] : memref<1x8x128xf32, #tpu.memory_space<vmem>>, vector<1x8x128xf32>
      tpu.vector_store %arg5[%c0_17, %c0_18, %c0_19], %22 {strides = array<i32>} : memref<1x8x128xf32, #tpu.memory_space<vmem>>, vector<1x8x128xf32>,
    } else {
    }
    return
  }
  func.func @transform_0(%arg0: i32, %arg1: i32) -> (i32, i32) {
    %c0_i32 = arith.constant 0 : i32
    return %arg0, %arg1 : i32, i32
  }
  func.func @transform_1(%arg0: i32, %arg1: i32) -> (i32, i32) {
    %c0_i32 = arith.constant 0 : i32
    %c0_i32_0 = arith.constant 0 : i32
    return %arg1, %c0_i32 : i32, i32
  }
  func.func @transform_2(%arg0: i32, %arg1: i32) -> (i32, i32) {
    %c0_i32 = arith.constant 0 : i32
    %c0_i32_0 = arith.constant 0 : i32
    return %arg0, %c0_i32 : i32, i32
  }
  func.func @transform_3(%arg0: i32, %arg1: i32) -> (i32, i32, i32) {
    %c0_i32 = arith.constant 0 : i32
    %c0_i32_0 = arith.constant 0 : i32
    %c0_i32_1 = arith.constant 0 : i32
    return %arg0, %c0_i32, %c0_i32_0 : i32, i32, i32
  }
}

</mosaic_0001>

<llo_original>
// kernel: _lambda_.1
$region0: #{_lambda_.1}
  #allocation0 [shape = 'u32[]', space=smem, size = 0x4, offset = 0x4, fixed_abs, tag = 'smem constant byte address 0x4 - core index']
  #allocation1 [shape = 'u32[144,128]{1,0:T(1,128)}', space=vmem, size = 0x12000, scoped, tag = 'internal scratch']
  #allocation2 [shape = 'f32[32,128]{1,0:T(8,128)}', space=vmem, size = 0x4000, scoped, tag = 'scratch operand']
  %s0 = inlined_call_operand.vmem [shape: bf16[128,64], index: 0, kind: input, shape index: {}]
  %s1 = inlined_call_operand.vmem [shape: bf16[64,128], index: 1, kind: input, shape index: {}]
  %s2 = inlined_call_operand.vmem [shape: bf16[128,128], index: 2, kind: output, shape index: {0}]
  %s3 = inlined_call_operand.vmem [shape: f32[4,8,128], index: 3, kind: output, shape index: {1}]
  %4 = xla_tuple %s2, %s3
  %s5 = sld [smem:[#allocation0]]
  $region57: #{_lambda_.1} parent=0
    _
  %s7 = ssub.s32 1, %s5
  %s8 = scalar_select 0, %s7, %s5
  loop: start=0, step=1, limit=6
  $region2: #{_lambda_.1} parent=0 // loop_pre_header
    _
  $region3: #{_lambda_.1} parent=0 // loop_header
    %s10 = sphi 0, %s14
    %p11 = scmp.ge.s32.totalorder %s10, 6
    %s17 = sphi 0, %s29
    %s18 = sphi 0, %s25
    %s19 = sphi 0, %s17
    %s20 = sphi 0, %s18
    %s21 = sphi 0, %s19
    %s22 = sphi 0, %s20
    %s34 = sphi 0, %s36
    %s37 = sphi 0, %s34
    %s38 = sphi 0, %s37
    %s54 = sphi 0, %s38
    %s60 = sphi 0, %s62
    %s63 = sphi 0, %s60
    %s64 = sphi 0, %s63
    %s80 = sphi 0, %s64
    %s86 = sphi 0, %s88
    %s89 = sphi 0, %s86
    %s90 = sphi 0, %s89
    %s106 = sphi 0, %s90
    %s112 = sphi 0, %s114
    %s115 = sphi 0, %s112
    %s116 = sphi 0, %s115
    %s132 = sphi 0, %s116
  $region4: #{_lambda_.1} parent=0 // loop_header_branch
    %13 = sbr.rel (%p11) target = $region8
  $region5: #{_lambda_.1} parent=0 // loop_body
    %s15 = ssub.s32 %s10, 1
    %s16 = ssub.s32 %s10, 2
    %s23 = sadd.s32 1, %s18
    %p24 = scmp.ge.s32.totalorder %s23, 1
    %s25 = scalar_select %p24, 0, %s23
    %s26 = sadd.s32 1, %s17
    %s27 = scalar_select %p24, %s26, %s17
    %p28 = scmp.ge.s32.totalorder %s27, 4
    %s29 = scalar_select %p28, 0, %s27
    %s30 = ssub.s32 %s17, %s29
    %s31 = ssub.s32 %s18, %s25
    %s32 = sor.u32 %s30, %s31
    %p33 = scmp.eq.s32.totalorder %s32, 0
    %s35 = sadd.s32 %s34, 1
    %s36 = scalar_select %p33, %s34, %s35
    %p39 = pneg %p33
    %p40 = scmp.eq.s32.totalorder %s10, 3
    %p41 = por %p39, %p40
    %p42 = scmp.ne.s32.totalorder %s34, %s37
    %p43 = scmp.eq.s32.totalorder %s10, 0
    %p44 = por %p42, %p43
    %p45 = scmp.ne.s32.totalorder %s34, %s37
    %p46 = scmp.eq.s32.totalorder %s15, 3
    %p47 = por %p45, %p46
    %p48 = scmp.ne.s32.totalorder %s37, %s38
    %p49 = scmp.eq.s32.totalorder %s15, 0
    %p50 = por %p48, %p49
    %p51 = scmp.ne.s32.totalorder %s37, %s38
    %p52 = scmp.eq.s32.totalorder %s16, 3
    %p53 = por %p51, %p52
    %p55 = scmp.ne.s32.totalorder %s38, %s54
    %p56 = scmp.eq.s32.totalorder %s16, 0
    %p57 = por %p55, %p56
    %s58 = ssub.s32 %s18, %s25
    %p59 = scmp.eq.s32.totalorder %s58, 0
    %s61 = sadd.s32 %s60, 1
    %s62 = scalar_select %p59, %s60, %s61
    %p65 = pneg %p59
    %p66 = scmp.eq.s32.totalorder %s10, 3
    %p67 = por %p65, %p66
    %p68 = scmp.ne.s32.totalorder %s60, %s63
    %p69 = scmp.eq.s32.totalorder %s10, 0
    %p70 = por %p68, %p69
    %p71 = scmp.ne.s32.totalorder %s60, %s63
    %p72 = scmp.eq.s32.totalorder %s15, 3
    %p73 = por %p71, %p72
    %p74 = scmp.ne.s32.totalorder %s63, %s64
    %p75 = scmp.eq.s32.totalorder %s15, 0
    %p76 = por %p74, %p75
    %p77 = scmp.ne.s32.totalorder %s63, %s64
    %p78 = scmp.eq.s32.totalorder %s16, 3
    %p79 = por %p77, %p78
    %p81 = scmp.ne.s32.totalorder %s64, %s80
    %p82 = scmp.eq.s32.totalorder %s16, 0
    %p83 = por %p81, %p82
    %s84 = ssub.s32 %s17, %s29
    %p85 = scmp.eq.s32.totalorder %s84, 0
    %s87 = sadd.s32 %s86, 1
    %s88 = scalar_select %p85, %s86, %s87
    %p91 = pneg %p85
    %p92 = scmp.eq.s32.totalorder %s10, 3
    %p93 = por %p91, %p92
    %p94 = scmp.ne.s32.totalorder %s86, %s89
    %p95 = scmp.eq.s32.totalorder %s10, 0
    %p96 = por %p94, %p95
    %p97 = scmp.ne.s32.totalorder %s86, %s89
    %p98 = scmp.eq.s32.totalorder %s15, 3
    %p99 = por %p97, %p98
    %p100 = scmp.ne.s32.totalorder %s89, %s90
    %p101 = scmp.eq.s32.totalorder %s15, 0
    %p102 = por %p100, %p101
    %p103 = scmp.ne.s32.totalorder %s89, %s90
    %p104 = scmp.eq.s32.totalorder %s16, 3
    %p105 = por %p103, %p104
    %p107 = scmp.ne.s32.totalorder %s90, %s106
    %p108 = scmp.eq.s32.totalorder %s16, 0
    %p109 = por %p107, %p108
    %s110 = ssub.s32 %s17, %s29
    %p111 = scmp.eq.s32.totalorder %s110, 0
    %s113 = sadd.s32 %s112, 1
    %s114 = scalar_select %p111, %s112, %s113
    %p117 = pneg %p111
    %p118 = scmp.eq.s32.totalorder %s10, 3
    %p119 = por %p117, %p118
    %p120 = scmp.ne.s32.totalorder %s112, %s115
    %p121 = scmp.eq.s32.totalorder %s10, 0
    %p122 = por %p120, %p121
    %p123 = scmp.ne.s32.totalorder %s112, %s115
    %p124 = scmp.eq.s32.totalorder %s15, 3
    %p125 = por %p123, %p124
    %p126 = scmp.ne.s32.totalorder %s115, %s116
    %p127 = scmp.eq.s32.totalorder %s15, 0
    %p128 = por %p126, %p127
    %p129 = scmp.ne.s32.totalorder %s115, %s116
    %p130 = scmp.eq.s32.totalorder %s16, 3
    %p131 = por %p129, %p130
    %p133 = scmp.ne.s32.totalorder %s116, %s132
    %p134 = scmp.eq.s32.totalorder %s16, 0
    %p135 = por %p133, %p134
    %p136 = scmp.le.s32.totalorder 1, %s10
    %p137 = scmp.lt.s32.totalorder %s10, 5
    %p138 = pnand %p136, %p137
    %p139 = pneg %p138
    // Predicated region
    $region9: #{_lambda_.1} parent=5 // pred_check
      _
    $region10: #{_lambda_.1} parent=5 // pred_check_branch
      %141 = sbr.rel (%p138) target = $region12
    $region11: #{_lambda_.1} parent=5 // pred_region
      %s142 = ssub.s32 %s10, 1
      // Predicated region
      $region13: #{_lambda_.1} parent=11 // pred_check
        %p143 = pneg %p76
      $region14: #{_lambda_.1} parent=11 // pred_check_branch
        %145 = sbr.rel (%p143) target = $region16
      $region15: #{_lambda_.1} parent=11 // pred_region
        %s146 = smul.u32 8, %s20
        %p147 = scmp.lt.s32.totalorder %s146, 7
        %s148 = scalar_select %p147, %s146, 7
        %s149 = smul.addr %s148, 4
        %s150 = scalar_lea.vmem %s1, %s149
        %s151 = smul.u32 8, %s20
      $region16: #{_lambda_.1} parent=11 // pred_fallthru
        _
    $region12: #{_lambda_.1} parent=5 // pred_fallthru
      _
    %p152 = scmp.lt.s32.totalorder %s10, 4
    // Predicated region
    $region17: #{_lambda_.1} parent=5 // pred_check
      %p153 = pneg %p152
    $region18: #{_lambda_.1} parent=5 // pred_check_branch
      %155 = sbr.rel (%p153) target = $region20
    $region19: #{_lambda_.1} parent=5 // pred_region
      // Predicated region
      $region21: #{_lambda_.1} parent=19 // pred_check
        %p156 = pneg %p44
      $region22: #{_lambda_.1} parent=19 // pred_check_branch
        %158 = sbr.rel (%p156) target = $region24
      $region23: #{_lambda_.1} parent=19 // pred_region
        %s159 = smul.u32 4, %s17
        %p160 = scmp.lt.s32.totalorder %s159, 15
        %s161 = scalar_select %p160, %s159, 15
        %p162 = scmp.lt.s32.totalorder %s18, 0
        %s163 = scalar_select %p162, %s18, 0
        %s164 = sadd.s32 %s163, %s161
        %s165 = smul.addr %s164, 4
        %s166 = scalar_lea.vmem %s0, %s165
        %s167 = smul.u32 4, %s17
      $region24: #{_lambda_.1} parent=19 // pred_fallthru
        _
    $region20: #{_lambda_.1} parent=5 // pred_fallthru
      _
    %p168 = scmp.le.s32.totalorder 1, %s10
    %p169 = scmp.lt.s32.totalorder %s10, 5
    %p170 = pnand %p168, %p169
    %p171 = pneg %p170
    // Predicated region
    $region25: #{_lambda_.1} parent=5 // pred_check
      _
    $region26: #{_lambda_.1} parent=5 // pred_check_branch
      %173 = sbr.rel (%p170) target = $region28
    $region27: #{_lambda_.1} parent=5 // pred_region
      %s174 = ssub.s32 %s10, 1
      %s175 = smul.u32 4, %s19
      %p176 = scmp.lt.s32.totalorder %s175, 15
      %s177 = scalar_select %p176, %s175, 15
      %p178 = scmp.lt.s32.totalorder %s20, 0
      %s179 = scalar_select %p178, %s20, 0
      %s180 = sadd.s32 %s179, %s177
      %s181 = smul.addr %s180, 4
      %s182 = scalar_lea.vmem %s0, %s181
      %p183 = pneg %p50
      %p184 = pneg %p47
      %s185 = smul.u32 8, %s20
      %p186 = scmp.lt.s32.totalorder %s185, 7
      %s187 = scalar_select %p186, %s185, 7
      %s188 = smul.addr %s187, 4
      %s189 = scalar_lea.vmem %s1, %s188
      %p190 = pneg %p76
      %p191 = pneg %p73
      %p192 = pneg %p102
      %p193 = pneg %p99
      %s194 = smul.u32 4, %s19
      %p195 = scmp.lt.s32.totalorder %s194, 15
      %s196 = scalar_select %p195, %s194, 15
      %s197 = smul.addr %s196, 4
      %s198 = scalar_lea.vmem %s2, %s197
      %p199 = pneg %p128
      %p200 = pneg %p125
      %p201 = scmp.lt.s32.totalorder %s19, 3
      %s202 = scalar_select %p201, %s19, 3
      %s203 = smul.addr %s202, 8
      %s204 = scalar_lea.vmem %s3, %s203
      %s205 = smul.u32 4, %s19
      %p206 = scmp.lt.s32.totalorder %s205, 15
      %s207 = scalar_select %p206, %s205, 15
      %p208 = scmp.lt.s32.totalorder %s20, 0
      %s209 = scalar_select %p208, %s20, 0
      %s210 = sadd.s32 %s209, %s207
      %s211 = smul.addr %s210, 4
      %s212 = scalar_lea.vmem %s0, %s211
      %s213 = smul.u32 4, %s19
      %s214 = smul.u32 8, %s20
      %p215 = scmp.lt.s32.totalorder %s214, 7
      %s216 = scalar_select %p215, %s214, 7
      %s217 = smul.addr %s216, 4
      %s218 = scalar_lea.vmem %s1, %s217
      %s219 = smul.u32 8, %s20
      %s220 = smul.u32 4, %s19
      %p221 = scmp.lt.s32.totalorder %s220, 15
      %s222 = scalar_select %p221, %s220, 15
      %s223 = smul.addr %s222, 4
      %s224 = scalar_lea.vmem %s2, %s223
      %s225 = smul.u32 4, %s19
      %p226 = scmp.lt.s32.totalorder %s19, 3
      %s227 = scalar_select %p226, %s19, 3
      %s228 = smul.addr %s227, 8
      %s229 = scalar_lea.vmem %s3, %s228
      %p231 = scmp.eq.s32.totalorder %s20, 0
      // Predicated region
      $region29: #{_lambda_.1} parent=27 // pred_check
        %p232 = pneg %p231
      $region30: #{_lambda_.1} parent=27 // pred_check_branch
        %234 = sbr.rel (%p232) target = $region32
      $region31: #{_lambda_.1} parent=27 // pred_region
        %235 = vst [vmem:[#allocation2] sm:$0xff] 0.0
        %236 = vst [vmem:[#allocation2 + $0x8] sm:$0xff] 0.0
        %237 = vst [vmem:[#allocation2 + $0x10] sm:$0xff] 0.0
        %238 = vst [vmem:[#allocation2 + $0x18] sm:$0xff] 0.0
      $region32: #{_lambda_.1} parent=27 // pred_fallthru
        _
      %v239 = vld [vmem:[#allocation2] sm:$0xff]
      %v240 = vld [vmem:[#allocation2 + $0x8] sm:$0xff]
      %v241 = vld [vmem:[#allocation2 + $0x10] sm:$0xff]
      %v242 = vld [vmem:[#allocation2 + $0x18] sm:$0xff]
      %v243 = vld [vmem:[%s212] sm:$0xf]
      %v244 = vld [vmem:[%s212 + $0x4] sm:$0xf]
      %v245 = vld [vmem:[%s212 + $0x8] sm:$0xf]
      %v246 = vld [vmem:[%s212 + $0xc] sm:$0xf]
      %v247 = vld [vmem:[%s218] sm:$0xf]
      %v248 = vld [vmem:[%s218 + $0x4] sm:$0xf]
      %v249 = vld [vmem:[%s218 + $0x8] sm:$0xf]
      %v250 = vld [vmem:[%s218 + $0xc] sm:$0xf]
      %v251 = vld [vmem:[%s218 + $0x10] sm:$0xf]
      %v252 = vld [vmem:[%s218 + $0x14] sm:$0xf]
      %v253 = vld [vmem:[%s218 + $0x18] sm:$0xf]
      %v254 = vld [vmem:[%s218 + $0x1c] sm:$0xf]
      %v259 = vunpack.c.l.b16 %v243
      %v260 = vunpack.c.l.b16 %v244
      %v261 = vunpack.c.l.b16 %v245
      %v262 = vunpack.c.l.b16 %v246
      %v263 = vpack.c.b16 %v260, %v259
      %v264 = vpack.c.b16 %v262, %v261
      %v273 = vunpack.c.l.b16 %v247
      %v274 = vunpack.c.l.b16 %v248
      %v275 = vunpack.c.l.b16 %v249
      %v276 = vunpack.c.l.b16 %v250
      %v277 = vunpack.c.l.b16 %v251
      %v278 = vunpack.c.l.b16 %v252
      %v279 = vunpack.c.l.b16 %v253
      %v280 = vunpack.c.l.b16 %v254
      %v281 = vpack.c.b16 %v274, %v273
      %v282 = vpack.c.b16 %v276, %v275
      %v283 = vpack.c.b16 %v278, %v277
      %v284 = vpack.c.b16 %v280, %v279
      %vm289 = vcmask 523264
      %v291 = vsel %vm289, %v263, 0
      %v294 = vsel %vm289, %v264, 0
      %296 = vmatprep.subr.bf16.mxu0 0
      %297 = vmatpush1.bf16.msra.mxu0 %v281
      %298 = vmatprep.subr.bf16.mxu0 0
      %299 = vmatpush1.bf16.msra.mxu0 %v282
      %300 = vmatprep.subr.bf16.mxu0 0
      %301 = vmatpush1.bf16.msra.mxu0 %v283
      %302 = vmatprep.subr.bf16.mxu0 0
      %303 = vmatpush1.bf16.msra.mxu0 %v284
      %304 = vmatprep.subr.bf16.mxu0 0
      %305 = vmatpush1.bf16.msra.mxu0 0
      %306 = vmatprep.subr.bf16.mxu0 0
      %307 = vmatpush1.bf16.msra.mxu0 0
      %308 = vmatprep.subr.bf16.mxu0 0
      %309 = vmatpush1.bf16.msra.mxu0 0
      %310 = vmatprep.subr.bf16.mxu0 0
      %311 = vmatpush1.bf16.msra.mxu0 0
      %312 = vmatprep.subr.bf16.mxu0 0
      %313 = vmatpush1.bf16.msra.mxu0 0
      %314 = vmatprep.subr.bf16.mxu0 0
      %315 = vmatpush1.bf16.msra.mxu0 0
      %316 = vmatprep.subr.bf16.mxu0 0
      %317 = vmatpush1.bf16.msra.mxu0 0
      %318 = vmatprep.subr.bf16.mxu0 0
      %319 = vmatpush1.bf16.msra.mxu0 0
      %320 = vmatprep.subr.bf16.mxu0 0
      %321 = vmatpush1.bf16.msra.mxu0 0
      %322 = vmatprep.subr.bf16.mxu0 0
      %323 = vmatpush1.bf16.msra.mxu0 0
      %324 = vmatprep.subr.bf16.mxu0 0
      %325 = vmatpush1.bf16.msra.mxu0 0
      %326 = vmatprep.subr.bf16.mxu0 0
      %327 = vmatpush1.bf16.msra.mxu0 0
      %328 = vmatprep.mubr.bf16.mxu0 0
      %329 = vmatmul.mubr.bf16.gmra.mrb[0].mxu0 %v291
      %v330 = vpop.f32.mrb[0].mxu0
      %v331 = vadd.f32 0.0, %v330
      %v332 = vpop.f32.mrb[0].mxu0
      %v333 = vpop.f32.mrb[0].mxu0
      %v334 = vadd.f32 0.0, %v333
      %v335 = vpop.f32.mrb[0].mxu0
      %336 = vmatprep.mubr.bf16.mxu0 0
      %337 = vmatmul.mubr.bf16.gmra.mrb[0].mxu0 %v294
      %v338 = vpop.f32.mrb[0].mxu0
      %v339 = vadd.f32 0.0, %v338
      %v340 = vpop.f32.mrb[0].mxu0
      %v341 = vpop.f32.mrb[0].mxu0
      %v342 = vadd.f32 0.0, %v341
      %v343 = vpop.f32.mrb[0].mxu0
      %344 = vdwg.mxu0
      %v345 = vadd.f32 %v239, %v331
      %v346 = vadd.f32 %v240, %v334
      %v347 = vadd.f32 %v241, %v339
      %v348 = vadd.f32 %v242, %v342
      %349 = vst [vmem:[#allocation2] sm:$0xff] %v345
      %350 = vst [vmem:[#allocation2 + $0x8] sm:$0xff] %v346
      %351 = vst [vmem:[#allocation2 + $0x10] sm:$0xff] %v347
      %352 = vst [vmem:[#allocation2 + $0x18] sm:$0xff] %v348
      // Predicated region
      $region33: #{_lambda_.1} parent=27 // pred_check
        %p353 = pneg %p231
      $region34: #{_lambda_.1} parent=27 // pred_check_branch
        %355 = sbr.rel (%p353) target = $region36
      $region35: #{_lambda_.1} parent=27 // pred_region
        %v356 = vld [vmem:[#allocation2] sm:$0xff]
        %v357 = vld [vmem:[#allocation2 + $0x8] sm:$0xff]
        %v358 = vld [vmem:[#allocation2 + $0x10] sm:$0xff]
        %v359 = vld [vmem:[#allocation2 + $0x18] sm:$0xff]
        %v360 = vpack.c.bf16 %v357, %v356
        %v361 = vpack.c.bf16 %v359, %v358
        %v364 = vunpack.c.l.b16 %v360
        %v365 = vunpack.c.h.b16 %v360
        %v366 = vunpack.c.l.b16 %v361
        %v367 = vunpack.c.h.b16 %v361
        %v368 = vpack.c.b16 %v364, %v364
        %v369 = vpack.c.b16 %v365, %v365
        %v370 = vpack.c.b16 %v366, %v366
        %v371 = vpack.c.b16 %v367, %v367
        %376 = vst [vmem:[%s224] sm:$0xf] %v368
        %377 = vst [vmem:[%s224 + $0x4] sm:$0xf] %v369
        %378 = vst [vmem:[%s224 + $0x8] sm:$0xf] %v370
        %379 = vst [vmem:[%s224 + $0xc] sm:$0xf] %v371
        %v380 = vadd.f32 %v356, %v357
        %v381 = vadd.f32 %v380, %v358
        %v382 = vadd.f32 %v381, %v359
        %v383 = vrot.slane %v382, 4
        %v384 = vadd.f32 %v382, %v383
        %v385 = vrot.slane %v384, 2
        %v386 = vadd.f32 %v384, %v385
        %v387 = vrot.slane %v386, 1
        %v388 = vadd.f32 %v386, %v387
        %v389 = vmul.f32 %v356, %v356
        %v390 = vmul.f32 %v357, %v357
        %v391 = vmul.f32 %v358, %v358
        %v392 = vmul.f32 %v359, %v359
        %v393 = vadd.f32 %v389, %v390
        %v394 = vadd.f32 %v393, %v391
        %v395 = vadd.f32 %v394, %v392
        %v396 = vrot.slane %v395, 4
        %v397 = vadd.f32 %v395, %v396
        %v398 = vrot.slane %v397, 2
        %v399 = vadd.f32 %v397, %v398
        %v400 = vrot.slane %v399, 1
        %v401 = vadd.f32 %v399, %v400
        %vm402 = vcmask 1040384
        %v403 = vsel %vm402, %v388, %v401
        %vm404 = vcmask 1041408
        %v405 = vsel %vm404, %v403, 0.0
        %406 = vst [vmem:[%s229] sm:$0xff] %v405
      $region36: #{_lambda_.1} parent=27 // pred_fallthru
        _
      %s407 = smul.u32 4, %s19
      %p408 = scmp.lt.s32.totalorder %s407, 15
      %s409 = scalar_select %p408, %s407, 15
      %s410 = smul.addr %s409, 4
      %s411 = scalar_lea.vmem %s2, %s410
      %p412 = scmp.lt.s32.totalorder %s19, 3
      %s413 = scalar_select %p412, %s19, 3
      %s414 = smul.addr %s413, 8
      %s415 = scalar_lea.vmem %s3, %s414
      // Predicated region
      $region37: #{_lambda_.1} parent=27 // pred_check
        %p416 = pneg %p99
      $region38: #{_lambda_.1} parent=27 // pred_check_branch
        %418 = sbr.rel (%p416) target = $region40
      $region39: #{_lambda_.1} parent=27 // pred_region
        %s419 = smul.u32 4, %s19
      $region40: #{_lambda_.1} parent=27 // pred_fallthru
        _
      // Predicated region
      $region41: #{_lambda_.1} parent=27 // pred_check
        %p420 = pneg %p125
      $region42: #{_lambda_.1} parent=27 // pred_check_branch
        %422 = sbr.rel (%p420) target = $region44
      $region43: #{_lambda_.1} parent=27 // pred_region
        _
      $region44: #{_lambda_.1} parent=27 // pred_fallthru
        _
    $region28: #{_lambda_.1} parent=5 // pred_fallthru
      _
    %p423 = scmp.le.s32.totalorder 2, %s10
    // Predicated region
    $region45: #{_lambda_.1} parent=5 // pred_check
      %p424 = pneg %p423
    $region46: #{_lambda_.1} parent=5 // pred_check_branch
      %426 = sbr.rel (%p424) target = $region48
    $region47: #{_lambda_.1} parent=5 // pred_region
      %s427 = ssub.s32 %s10, 2
      // Predicated region
      $region49: #{_lambda_.1} parent=47 // pred_check
        %p428 = pneg %p105
      $region50: #{_lambda_.1} parent=47 // pred_check_branch
        %430 = sbr.rel (%p428) target = $region52
      $region51: #{_lambda_.1} parent=47 // pred_region
        %s431 = smul.u32 4, %s21
        %p432 = scmp.lt.s32.totalorder %s431, 15
        %s433 = scalar_select %p432, %s431, 15
        %s434 = smul.addr %s433, 4
        %s435 = scalar_lea.vmem %s2, %s434
      $region52: #{_lambda_.1} parent=47 // pred_fallthru
        _
      // Predicated region
      $region53: #{_lambda_.1} parent=47 // pred_check
        %p436 = pneg %p131
      $region54: #{_lambda_.1} parent=47 // pred_check_branch
        %438 = sbr.rel (%p436) target = $region56
      $region55: #{_lambda_.1} parent=47 // pred_region
        %p439 = scmp.lt.s32.totalorder %s21, 3
        %s440 = scalar_select %p439, %s21, 3
        %s441 = smul.addr %s440, 8
        %s442 = scalar_lea.vmem %s3, %s441
      $region56: #{_lambda_.1} parent=47 // pred_fallthru
        _
    $region48: #{_lambda_.1} parent=5 // pred_fallthru
      _
  $region6: #{_lambda_.1} parent=0 // loop_footer
    %s14 = sadd.s32 1, %s10
  $region7: #{_lambda_.1} parent=0 // loop_footer_branch
    %9 = sbr.rel target = $region3
  $region8: #{_lambda_.1} parent=0 // loop_exit
    _

</llo_original>
